<compile_context>
chip_gen: v7x
topology: tpu7x:2x2x1
jax: 0.10.0
libtpu: 0.0.40
codegen_flags: <defaults>
</compile_context>

<pallas_src>
import functools
from typing import Any, NamedTuple

import jax
import jax.numpy as jnp
from jax.experimental import pallas as pl
from jax.experimental.pallas import tpu as pltpu

_LANE = 128
_SUBLANE = 16


def _round_up(x, m):
    return ((x + m - 1) // m) * m


def _vmem_capacity_bytes():
    """Per-TensorCore VMEM capacity; conservative (v7x) fallback."""
    try:
        info = pltpu.get_tpu_info()
        cap = int(getattr(info, "vmem_capacity_bytes", 0) or 0)
        if cap > 0:
            return cap
    except Exception:
        pass
    return 64 * 1024 * 1024


def _pick_chunk(total_p, max_chunk):
    """Largest multiple of 128 <= max_chunk that divides total_p (mult of 128)."""
    c = max(_LANE, (min(max_chunk, total_p) // _LANE) * _LANE)
    while c > _LANE and total_p % c:
        c -= _LANE
    return c


class MLPPlan(NamedTuple):
    d_in: int
    hidden: int
    d_out: int
    d_in_p: int
    h_pad: int
    d_out_p: int
    block_h: int
    block_n: int
    resident: bool
    matmul_dtype: Any
    vmem_cap: int


def make_mlp_plan(input_dim, hidden_dim, output_dim, matmul_dtype=jnp.bfloat16):
    """Decide padding / tiling / kernel path from weight sizes + VMEM capacity."""
    cap = _vmem_capacity_bytes()
    budget = int(cap * 0.72)       # ~46 MiB on v7x (64 MiB/TC), ~92 MiB on v5e/v6e
    bpe = jnp.dtype(matmul_dtype).itemsize

    d_in_p = _round_up(input_dim, _LANE)
    h_pad = _round_up(hidden_dim, _LANE)
    d_out_p = _round_up(output_dim, _LANE)

    def act_bytes(bb, bh, bn, with_acc):
        # block_b-scaled VMEM: dbl-buffered f32 x tile + in-kernel bf16 x copy
        # + f32 hidden chunk + its bf16 copy + dbl-buffered output tile (+ acc).
        b = bb * (2 * d_in_p * 4 + d_in_p * bpe + bh * (4 + bpe) + 2 * bn * 4)
        if with_acc:
            b += bb * bn * 4
        return b

    # --- resident path: weights live in VMEM (DMA'd from HBM once per call) ---
    resident_fixed = (2 * (d_in_p * h_pad + h_pad * d_out_p) * bpe
                      + 2 * (h_pad + d_out_p) * 4)
    if resident_fixed + act_bytes(256, h_pad, d_out_p, False) <= budget:
        return MLPPlan(input_dim, hidden_dim, output_dim, d_in_p, h_pad, d_out_p,
                       block_h=h_pad, block_n=d_out_p, resident=True,
                       matmul_dtype=matmul_dtype, vmem_cap=cap)

    # --- chunked path: stream w1/w2 in (block_h, block_n) pieces -------------
    block_h = _pick_chunk(h_pad, 512)
    block_n = _pick_chunk(d_out_p, 1024)

    def fixed(bh, bn):
        return 2 * (d_in_p * bh + bh * bn) * bpe + 2 * (bh + bn) * 4

    while (fixed(block_h, block_n) + act_bytes(256, block_h, block_n, True) > budget
           and (block_h > _LANE or block_n > _LANE)):
        if block_n >= block_h and block_n > _LANE:
            block_n = _pick_chunk(d_out_p, block_n // 2)
        else:
            block_h = _pick_chunk(h_pad, block_h // 2)

    return MLPPlan(input_dim, hidden_dim, output_dim, d_in_p, h_pad, d_out_p,
                   block_h=block_h, block_n=block_n, resident=False,
                   matmul_dtype=matmul_dtype, vmem_cap=cap)


def prepare_mlp_params(w1, b1, w2, b2, plan):
    """Pad + cast weights/biases ONCE, outside the per-call hot path.

    w1: (d_in, hidden), w2: (hidden, d_out) -- pre-transposed vs torch Linear.
    """
    mdt = plan.matmul_dtype
    w1q = jnp.pad(jnp.asarray(w1),
                  ((0, plan.d_in_p - plan.d_in),
                   (0, plan.h_pad - plan.hidden))).astype(mdt)
    w2q = jnp.pad(jnp.asarray(w2),
                  ((0, plan.h_pad - plan.hidden),
                   (0, plan.d_out_p - plan.d_out))).astype(mdt)
    b1p = jnp.pad(jnp.asarray(b1).astype(jnp.float32).reshape(1, -1),
                  ((0, 0), (0, plan.h_pad - plan.hidden)))
    b2p = jnp.pad(jnp.asarray(b2).astype(jnp.float32).reshape(1, -1),
                  ((0, 0), (0, plan.d_out_p - plan.d_out)))
    return w1q, b1p, w2q, b2p


# ----------------------------- kernels --------------------------------------

def _mlp_resident_kernel(x_ref, w1_ref, b1_ref, w2_ref, b2_ref, o_ref, *,
                         matmul_dtype):
    """Single-step relu(x @ w1 + b1) @ w2 + b2 with VMEM-resident weights."""
    x = x_ref[...].astype(matmul_dtype)                       # in-kernel cast
    h = jnp.dot(x, w1_ref[...], preferred_element_type=jnp.float32)
    h = jnp.maximum(h + b1_ref[...], 0.0)
    o = jnp.dot(h.astype(matmul_dtype), w2_ref[...],
                preferred_element_type=jnp.float32)
    o_ref[...] = (o + b2_ref[...]).astype(o_ref.dtype)


def _mlp_chunked_kernel(x_ref, w1_ref, b1_ref, w2_ref, b2_ref, o_ref, acc_ref, *,
                        matmul_dtype):
    """One (batch tile i, out-col tile j, hidden chunk k) step, streamed weights."""
    k = pl.program_id(2)

    @pl.when(k == 0)
    def _():
        # Initialize the accumulator with b2 -> the epilogue is a pure store.
        acc_ref[...] = jnp.broadcast_to(b2_ref[...], acc_ref.shape)

    x = x_ref[...].astype(matmul_dtype)                        # in-kernel cast
    # fc1 chunk: (tb, D_in) @ (D_in, tH); bias + ReLU are exact per chunk
    # because the contraction over D_in is not chunked.
    h = jnp.dot(x, w1_ref[...], preferred_element_type=jnp.float32)
    h = jnp.maximum(h + b1_ref[...], 0.0)
    # fc2 partial product accumulated over hidden chunks.
    acc_ref[...] += jnp.dot(h.astype(matmul_dtype), w2_ref[...],
                            preferred_element_type=jnp.float32)

    @pl.when(k == pl.num_programs(2) - 1)
    def _():
        o_ref[...] = acc_ref[...].astype(o_ref.dtype)


# ----------------------------- wrapper --------------------------------------

@functools.partial(jax.jit, static_argnames=("plan", "block_b"))
def mlp_forward(x, w1q, b1p, w2q, b2p, *, plan, block_b=None):
    """Fused MLP forward on pre-padded params: relu(x @ w1 + b1) @ w2 + b2."""
    assert x.shape[-1] == plan.d_in
    lead_shape = x.shape[:-1]
    x2 = x.reshape(-1, plan.d_in)
    B = x2.shape[0]
    out_dtype = x.dtype

    mdt = plan.matmul_dtype
    bpe = jnp.dtype(mdt).itemsize
    out_bpe = jnp.dtype(out_dtype).itemsize
    d_in_p, h_pad, d_out_p = plan.d_in_p, plan.h_pad, plan.d_out_p
    bh, bn = plan.block_h, plan.block_n

    cap = plan.vmem_cap
    budget = int(cap * 0.72)

    if plan.resident:
        fixed_bytes = (2 * (d_in_p * h_pad + h_pad * d_out_p) * bpe
                       + 2 * (h_pad + d_out_p) * 4)
    else:
        fixed_bytes = 2 * (d_in_p * bh + bh * bn) * bpe + 2 * (bh + bn) * 4

    def act_bytes(bb):
        b = bb * (2 * d_in_p * 4 + d_in_p * bpe + bh * (4 + bpe) + 2 * bn * out_bpe)
        if not plan.resident:
            b += bb * bn * 4        # f32 accumulator scratch
        return b

    if block_b is None:
        block_b = min(512, _round_up(B, _SUBLANE))
        # Streaming path: weight-byte reuse == block_b, so go bigger when the
        # batch and VMEM budget allow (v6e needs ~650 FLOP / weight byte).
        if (not plan.resident and B >= 2048
                and fixed_bytes + act_bytes(1024) <= budget):
            block_b = 1024
        # Megacore (v7x has 2 TCs): keep >= 2 batch tiles when batch allows.
        if B > _SUBLANE and _round_up(B, block_b) // block_b < 2:
            block_b = _round_up((B + 1) // 2, _SUBLANE)
        # Shrink under VMEM pressure.
        while block_b > _SUBLANE and fixed_bytes + act_bytes(block_b) > budget:
            block_b = max(_SUBLANE, _round_up(block_b // 2, _SUBLANE))

    B_pad = _round_up(B, block_b)
    n_b = B_pad // block_b
    n_n = d_out_p // bn
    n_h = h_pad // bh

    vmem_est = fixed_bytes + act_bytes(block_b)
    vmem_limit = max(32 * 1024 * 1024, int(vmem_est * 1.3) + (2 << 20))
    vmem_limit = min(vmem_limit, int(cap * 0.9))     # never exceed physical VMEM

    # Pad x only if needed (cast to bf16 happens on-tile inside the kernel).
    xp = x2
    if B_pad != B or d_in_p != plan.d_in:
        xp = jnp.pad(x2, ((0, B_pad - B), (0, d_in_p - plan.d_in)))

    # Cost estimate reflecting actual (re-)streaming traffic.
    flops = 2 * B_pad * (d_in_p * h_pad + h_pad * d_out_p)
    w1_bytes = d_in_p * h_pad * bpe
    w2_bytes = h_pad * d_out_p * bpe
    if plan.resident:
        w_traffic = w1_bytes + w2_bytes
    else:
        w_traffic = n_b * (n_n * w1_bytes + w2_bytes)
    bytes_accessed = (B_pad * d_in_p * 4 + w_traffic
                      + (h_pad + d_out_p) * 4 + B_pad * d_out_p * out_bpe)
    cost = pl.CostEstimate(flops=flops, transcendentals=0,
                           bytes_accessed=bytes_accessed)

    if plan.resident:
        grid = (n_b,)
        in_specs = [
            pl.BlockSpec((block_b, d_in_p), lambda i: (i, 0)),      # x tile
            pl.BlockSpec((d_in_p, h_pad), lambda i: (0, 0)),        # w1 (resident)
            pl.BlockSpec((1, h_pad), lambda i: (0, 0)),             # b1
            pl.BlockSpec((h_pad, d_out_p), lambda i: (0, 0)),       # w2 (resident)
            pl.BlockSpec((1, d_out_p), lambda i: (0, 0)),           # b2
        ]
        out_specs = pl.BlockSpec((block_b, d_out_p), lambda i: (i, 0))
        scratch_shapes = []
        dims = ("parallel",)
        kern = functools.partial(_mlp_resident_kernel, matmul_dtype=mdt)
    else:
        grid = (n_b, n_n, n_h)                 # reduction (hidden) axis last
        in_specs = [
            pl.BlockSpec((block_b, d_in_p), lambda i, j, k: (i, 0)),  # x tile
            pl.BlockSpec((d_in_p, bh), lambda i, j, k: (0, k)),       # w1 chunk
            pl.BlockSpec((1, bh), lambda i, j, k: (0, k)),            # b1 chunk
            pl.BlockSpec((bh, bn), lambda i, j, k: (k, j)),           # w2 chunk
            pl.BlockSpec((1, bn), lambda i, j, k: (0, j)),            # b2 chunk
        ]
        out_specs = pl.BlockSpec((block_b, bn), lambda i, j, k: (i, j))
        scratch_shapes = [pltpu.VMEM((block_b, bn), jnp.float32)]
        dims = ("parallel", "parallel", "arbitrary")
        kern = functools.partial(_mlp_chunked_kernel, matmul_dtype=mdt)

    out = pl.pallas_call(
        kern,
        out_shape=jax.ShapeDtypeStruct((B_pad, d_out_p), out_dtype),
        grid_spec=pltpu.PrefetchScalarGridSpec(
            num_scalar_prefetch=0,
            grid=grid,
            in_specs=in_specs,
            out_specs=out_specs,
            scratch_shapes=scratch_shapes,
        ),
        compiler_params=pltpu.CompilerParams(
            dimension_semantics=dims,
            vmem_limit_bytes=vmem_limit,
        ),
        cost_estimate=cost,
    )(xp, w1q, b1p, w2q, b2p)

    out = out[:B, :plan.d_out]
    return out.reshape(*lead_shape, plan.d_out)


def mlp_pallas(x, w1, b1, w2, b2, *, matmul_dtype=jnp.bfloat16, block_b=None):
    """One-shot convenience wrapper (plan + weight prep + forward)."""
    plan = make_mlp_plan(x.shape[-1], w1.shape[1], w2.shape[1], matmul_dtype)
    params = prepare_mlp_params(w1, b1, w2, b2, plan)
    return mlp_forward(x, *params, plan=plan, block_b=block_b)


# ----------------------------- test utilities -------------------------------

def init_mlp_params(key, input_dim, hidden_dim, output_dim, dtype=jnp.float32):
    """Deterministic init mimicking nn.Linear (uniform +-1/sqrt(fan_in)).

    Weights are stored pre-transposed: (in, out) instead of torch's (out, in).
    """
    k1, k2, k3, k4 = jax.random.split(key, 4)
    lim1 = 1.0 / (input_dim ** 0.5)
    lim2 = 1.0 / (hidden_dim ** 0.5)
    w1 = jax.random.uniform(k1, (input_dim, hidden_dim), dtype, -lim1, lim1)
    b1 = jax.random.uniform(k2, (hidden_dim,), dtype, -lim1, lim1)
    w2 = jax.random.uniform(k3, (hidden_dim, output_dim), dtype, -lim2, lim2)
    b2 = jax.random.uniform(k4, (output_dim,), dtype, -lim2, lim2)
    return w1, b1, w2, b2


def mlp_reference_f32(x, w1, b1, w2, b2):
    h = jnp.maximum(x @ w1 + b1[None, :], 0.0)
    return h @ w2 + b2[None, :]


def mlp_reference_mixed(x, w1, b1, w2, b2):
    """Same mixed-precision recipe as the kernel (bf16 matmuls, f32 accum)."""
    xb = x.astype(jnp.bfloat16)
    h = jnp.dot(xb, w1.astype(jnp.bfloat16),
                preferred_element_type=jnp.float32) + b1[None, :]
    h = jnp.maximum(h, 0.0)
    o = jnp.dot(h.astype(jnp.bfloat16), w2.astype(jnp.bfloat16),
                preferred_element_type=jnp.float32) + b2[None, :]
    return o.astype(x.dtype)


if __name__ == "__main__":
    key = jax.random.PRNGKey(0)
    kx, kp, kx2, kp2 = jax.random.split(key, 4)

    # --- Case 1: tiny shapes -> resident-weights single-pass kernel. --------
    batch, input_dim, hidden_dim, output_dim = 8, 32, 64, 16
    x = jax.random.normal(kx, (batch, input_dim), jnp.float32)
    w1, b1, w2, b2 = init_mlp_params(kp, input_dim, hidden_dim, output_dim)

    plan = make_mlp_plan(input_dim, hidden_dim, output_dim)
    params = prepare_mlp_params(w1, b1, w2, b2, plan)   # hoisted weight prep
    out = jax.block_until_ready(mlp_forward(x, *params, plan=plan))

    ref_mixed = mlp_reference_mixed(x, w1, b1, w2, b2)
    ref_f32 = mlp_reference_f32(x, w1, b1, w2, b2)
    assert out.shape == (batch, output_dim)
    assert jnp.allclose(out, ref_mixed, atol=2e-3, rtol=2e-3), (
        float(jnp.max(jnp.abs(out - ref_mixed))))
    assert jnp.allclose(out, ref_f32, atol=5e-2, rtol=5e-2), (
        float(jnp.max(jnp.abs(out - ref_f32))))

    # --- Case 2: force the chunked/streaming kernel (hidden + out-col tiling,
    #             multiple batch tiles) to validate the accumulator path too. -
    batch2, in2, hid2, outd2 = 40, 72, 320, 200
    x2 = jax.random.normal(kx2, (batch2, in2), jnp.float32)
    w1b, b1b, w2b, b2b = init_mlp_params(kp2, in2, hid2, outd2)
    plan2 = make_mlp_plan(in2, hid2, outd2)._replace(
        resident=False, block_h=128, block_n=128)
    params2 = prepare_mlp_params(w1b, b1b, w2b, b2b, plan2)
    out_c = jax.block_until_ready(
        mlp_forward(x2, *params2, plan=plan2, block_b=32))
    ref2 = mlp_reference_mixed(x2, w1b, b1b, w2b, b2b)
    assert out_c.shape == (batch2, outd2)
    assert jnp.allclose(out_c, ref2, atol=3e-3, rtol=3e-3), (
        float(jnp.max(jnp.abs(out_c - ref2))))

    print("KERNEL_OK")
</pallas_src>

<mosaic_0001>
module attributes {stable_mosaic.version = 11 : i64} {
  func.func @_mlp_resident_kernel(%arg0: i32, %arg1: memref<16x128xf32, #tpu.memory_space<vmem>>, %arg2: memref<128x128xbf16, #tpu.memory_space<vmem>>, %arg3: memref<1x128xf32, #tpu.memory_space<vmem>>, %arg4: memref<128x128xbf16, #tpu.memory_space<vmem>>, %arg5: memref<1x128xf32, #tpu.memory_space<vmem>>, %arg6: memref<16x128xf32, #tpu.memory_space<vmem>>) attributes {dimension_semantics = [#tpu.dimension_semantics<parallel>], iteration_bounds = array<i64: 1>, scalar_prefetch = 0 : i64, scratch_operands = 0 : i64, tpu.core_type = #tpu.core_type<tc>, window_params = [{transform_indices = @transform_0, window_bounds = array<i64: 16, 128>}, {pipeline_mode = #tpu.pipeline_mode<synchronous>, transform_indices = @transform_1, window_bounds = array<i64: 128, 128>}, {pipeline_mode = #tpu.pipeline_mode<synchronous>, transform_indices = @transform_2, window_bounds = array<i64: 1, 128>}, {pipeline_mode = #tpu.pipeline_mode<synchronous>, transform_indices = @transform_3, window_bounds = array<i64: 128, 128>}, {pipeline_mode = #tpu.pipeline_mode<synchronous>, transform_indices = @transform_4, window_bounds = array<i64: 1, 128>}, {transform_indices = @transform_5, window_bounds = array<i64: 16, 128>}]} {
    %c0 = arith.constant 0 : index
    %c0_0 = arith.constant 0 : index
    %0 = vector.load %arg1[%c0, %c0_0] : memref<16x128xf32, #tpu.memory_space<vmem>>, vector<16x128xf32>
    %1 = arith.truncf %0 : vector<16x128xf32> to vector<16x128xbf16>
    %c0_1 = arith.constant 0 : index
    %c0_2 = arith.constant 0 : index
    %2 = vector.load %arg2[%c0_1, %c0_2] : memref<128x128xbf16, #tpu.memory_space<vmem>>, vector<128x128xbf16>
    %cst = arith.constant dense<0.000000e+00> : vector<16x128xf32>
    %3 = tpu.matmul %1, %2, %cst {dimension_numbers = #tpu.dot_dimension_numbers<[1], [0], [0], [1], [0, 0, 1, 1], [], []>} : vector<16x128xbf16>, vector<128x128xbf16>, vector<16x128xf32> -> vector<16x128xf32>
    %c0_3 = arith.constant 0 : index
    %c0_4 = arith.constant 0 : index
    %4 = vector.load %arg3[%c0_3, %c0_4] : memref<1x128xf32, #tpu.memory_space<vmem>>, vector<1x128xf32>
    %5 = vector.broadcast %4 : vector<1x128xf32> to vector<16x128xf32>
    %6 = arith.addf %3, %5 : vector<16x128xf32>
    %cst_5 = arith.constant 0.000000e+00 : f32
    %7 = vector.broadcast %cst_5 : f32 to vector<16x128xf32>
    %8 = arith.maximumf %6, %7 : vector<16x128xf32>
    %9 = arith.truncf %8 : vector<16x128xf32> to vector<16x128xbf16>
    %c0_6 = arith.constant 0 : index
    %c0_7 = arith.constant 0 : index
    %10 = vector.load %arg4[%c0_6, %c0_7] : memref<128x128xbf16, #tpu.memory_space<vmem>>, vector<128x128xbf16>
    %cst_8 = arith.constant dense<0.000000e+00> : vector<16x128xf32>
    %11 = tpu.matmul %9, %10, %cst_8 {dimension_numbers = #tpu.dot_dimension_numbers<[1], [0], [0], [1], [0, 0, 1, 1], [], []>} : vector<16x128xbf16>, vector<128x128xbf16>, vector<16x128xf32> -> vector<16x128xf32>
    %c0_9 = arith.constant 0 : index
    %c0_10 = arith.constant 0 : index
    %12 = vector.load %arg5[%c0_9, %c0_10] : memref<1x128xf32, #tpu.memory_space<vmem>>, vector<1x128xf32>
    %13 = vector.broadcast %12 : vector<1x128xf32> to vector<16x128xf32>
    %14 = arith.addf %11, %13 : vector<16x128xf32>
    %c0_11 = arith.constant 0 : index
    %c0_12 = arith.constant 0 : index
    %15 = vector.load %arg6[%c0_11, %c0_12] : memref<16x128xf32, #tpu.memory_space<vmem>>, vector<16x128xf32>
    tpu.vector_store %arg6[%c0_11, %c0_12], %14 {strides = array<i32>} : memref<16x128xf32, #tpu.memory_space<vmem>>, vector<16x128xf32>,
    return
  }
  func.func @transform_0(%arg0: i32) -> (i32, i32) {
    %c0_i32 = arith.constant 0 : i32
    %c0_i32_0 = arith.constant 0 : i32
    return %arg0, %c0_i32 : i32, i32
  }
  func.func @transform_1(%arg0: i32) -> (i32, i32) {
    %c0_i32 = arith.constant 0 : i32
    %c0_i32_0 = arith.constant 0 : i32
    %c0_i32_1 = arith.constant 0 : i32
    return %c0_i32, %c0_i32_0 : i32, i32
  }
  func.func @transform_2(%arg0: i32) -> (i32, i32) {
    %c0_i32 = arith.constant 0 : i32
    %c0_i32_0 = arith.constant 0 : i32
    %c0_i32_1 = arith.constant 0 : i32
    return %c0_i32, %c0_i32_0 : i32, i32
  }
  func.func @transform_3(%arg0: i32) -> (i32, i32) {
    %c0_i32 = arith.constant 0 : i32
    %c0_i32_0 = arith.constant 0 : i32
    %c0_i32_1 = arith.constant 0 : i32
    return %c0_i32, %c0_i32_0 : i32, i32
  }
  func.func @transform_4(%arg0: i32) -> (i32, i32) {
    %c0_i32 = arith.constant 0 : i32
    %c0_i32_0 = arith.constant 0 : i32
    %c0_i32_1 = arith.constant 0 : i32
    return %c0_i32, %c0_i32_0 : i32, i32
  }
  func.func @transform_5(%arg0: i32) -> (i32, i32) {
    %c0_i32 = arith.constant 0 : i32
    %c0_i32_0 = arith.constant 0 : i32
    return %arg0, %c0_i32 : i32, i32
  }
}

</mosaic_0001>

<llo_original>
// kernel: mlp_forward.1
$region0: #{mlp_forward.1}
  #allocation0 [shape = 'u32[]', space=smem, size = 0x4, offset = 0x4, fixed_abs, tag = 'smem constant byte address 0x4 - core index']
  #allocation1 [shape = 'u32[144,128]{1,0:T(1,128)}', space=vmem, size = 0x12000, scoped, tag = 'internal scratch']
  %s0 = inlined_call_operand.vmem [shape: f32[16,128], index: 0, kind: input, shape index: {}]
  %s1 = inlined_call_operand.hbm [shape: bf16[128,128], index: 1, kind: input, shape index: {}]
  %s2 = inlined_call_operand.vmem [shape: f32[1,128], index: 2, kind: input, shape index: {}]
  %s3 = inlined_call_operand.hbm [shape: bf16[128,128], index: 3, kind: input, shape index: {}]
  %s4 = inlined_call_operand.vmem [shape: f32[1,128], index: 4, kind: input, shape index: {}]
  %s5 = inlined_call_operand.vmem [shape: f32[16,128], index: 5, kind: output, shape index: {}]
  %s6 = sld [smem:[#allocation0]]
  $region38: #{mlp_forward.1} parent=0
    _
  %s8 = ssub.s32 1, %s6
  %s9 = scalar_select 0, %s8, %s6
  $region1: #{mlp_forward.1} parent=0
    #allocation2 [shape = 'u8[32768]{0}', space=vmem, size = 0x8000, scoped, tag = 'input window, operand 1, single buffered']
    #allocation3 [shape = 's32[1]{0}', space=sflag, size = 0x4, scoped, tag = 'scoped memory for mlp_forward.1']
    #allocation4 [shape = 'u8[32768]{0}', space=vmem, size = 0x8000, scoped, tag = 'input window, operand 3, single buffered']
    #allocation5 [shape = 's32[1]{0}', space=sflag, size = 0x4, scoped, tag = 'scoped memory for mlp_forward.1']
    %10 = vsyncpa [#allocation3], 0
    %11 = vsyncpa [#allocation5], 0
    // Predicated region
    $region2: #{mlp_forward.1} parent=1 // pred_check
      _
    $region3: #{mlp_forward.1} parent=1 // pred_check_branch
      %13 = sbr.rel (0) target = $region5
    $region4: #{mlp_forward.1} parent=1 // pred_region
      _
    $region5: #{mlp_forward.1} parent=1 // pred_fallthru
      _
    // Predicated region
    $region6: #{mlp_forward.1} parent=1 // pred_check
      _
    $region7: #{mlp_forward.1} parent=1 // pred_check_branch
      %15 = sbr.rel (0) target = $region9
    $region8: #{mlp_forward.1} parent=1 // pred_region
      %s17 = ssub.s32 1024, 1024
      %18 = vsyncadd [#allocation3], %s17
      %s19 = sshll.u32 [#allocation2], 4
      %s20 = int_to_ptr.vmem [resolvable:$true] %s19
      %25 = dma.hbm_to_vmem [thread:$0]  %s1, 1024, %s20, [#allocation3], 64, 64, 4
    $region9: #{mlp_forward.1} parent=1 // pred_fallthru
      _
    // Predicated region
    $region10: #{mlp_forward.1} parent=1 // pred_check
      _
    $region11: #{mlp_forward.1} parent=1 // pred_check_branch
      %27 = sbr.rel (0) target = $region13
    $region12: #{mlp_forward.1} parent=1 // pred_region
      _
    $region13: #{mlp_forward.1} parent=1 // pred_fallthru
      _
    // Predicated region
    $region14: #{mlp_forward.1} parent=1 // pred_check
      _
    $region15: #{mlp_forward.1} parent=1 // pred_check_branch
      %29 = sbr.rel (0) target = $region17
    $region16: #{mlp_forward.1} parent=1 // pred_region
      %s31 = ssub.s32 1024, 1024
      %32 = vsyncadd [#allocation5], %s31
      %s33 = sshll.u32 [#allocation4], 4
      %s34 = int_to_ptr.vmem [resolvable:$true] %s33
      %39 = dma.hbm_to_vmem [thread:$0]  %s3, 1024, %s34, [#allocation5], 64, 64, 4
    $region17: #{mlp_forward.1} parent=1 // pred_fallthru
      _
    // Predicated region
    $region18: #{mlp_forward.1} parent=1 // pred_check
      _
    $region19: #{mlp_forward.1} parent=1 // pred_check_branch
      %41 = sbr.rel (0) target = $region21
    $region20: #{mlp_forward.1} parent=1 // pred_region
      _
    $region21: #{mlp_forward.1} parent=1 // pred_fallthru
      _
    // Predicated region
    $region22: #{mlp_forward.1} parent=1 // pred_check
      _
    $region23: #{mlp_forward.1} parent=1 // pred_check_branch
      %43 = sbr.rel (0) target = $region25
    $region24: #{mlp_forward.1} parent=1 // pred_region
      %44 = dma.done [#allocation3], 1024
    $region25: #{mlp_forward.1} parent=1 // pred_fallthru
      _
    // Predicated region
    $region26: #{mlp_forward.1} parent=1 // pred_check
      _
    $region27: #{mlp_forward.1} parent=1 // pred_check_branch
      %46 = sbr.rel (0) target = $region29
    $region28: #{mlp_forward.1} parent=1 // pred_region
      %47 = dma.done [#allocation5], 1024
    $region29: #{mlp_forward.1} parent=1 // pred_fallthru
      _
    %v49 = vld [vmem:[%s0] sm:$0xff]
    %v50 = vld [vmem:[%s0 + $0x8] sm:$0xff]
    %v51 = vpack.c.bf16 %v50, %v49
    %v52 = vld [vmem:[#allocation2] sm:$0xf]
    %v53 = vld [vmem:[#allocation2 + $0x4] sm:$0xf]
    %v54 = vld [vmem:[#allocation2 + $0x8] sm:$0xf]
    %v55 = vld [vmem:[#allocation2 + $0xc] sm:$0xf]
    %v56 = vld [vmem:[#allocation2 + $0x10] sm:$0xf]
    %v57 = vld [vmem:[#allocation2 + $0x14] sm:$0xf]
    %v58 = vld [vmem:[#allocation2 + $0x18] sm:$0xf]
    %v59 = vld [vmem:[#allocation2 + $0x1c] sm:$0xf]
    %v60 = vld [vmem:[#allocation2 + $0x20] sm:$0xf]
    %v61 = vld [vmem:[#allocation2 + $0x24] sm:$0xf]
    %v62 = vld [vmem:[#allocation2 + $0x28] sm:$0xf]
    %v63 = vld [vmem:[#allocation2 + $0x2c] sm:$0xf]
    %v64 = vld [vmem:[#allocation2 + $0x30] sm:$0xf]
    %v65 = vld [vmem:[#allocation2 + $0x34] sm:$0xf]
    %v66 = vld [vmem:[#allocation2 + $0x38] sm:$0xf]
    %v67 = vld [vmem:[#allocation2 + $0x3c] sm:$0xf]
    %v68 = vld [vmem:[%s2] sm:$0x1]
    %v70 = vlaneseq
    %v71 = vshrl.u32 %v70, 7
    %v72 = vsub.s32 0, %v71
    %v73 = vrot.slane %v68, %v72
    %v91 = vunpack.c.l.b16 %v52
    %v92 = vunpack.c.l.b16 %v53
    %v93 = vunpack.c.l.b16 %v54
    %v94 = vunpack.c.l.b16 %v55
    %v95 = vunpack.c.l.b16 %v56
    %v96 = vunpack.c.l.b16 %v57
    %v97 = vunpack.c.l.b16 %v58
    %v98 = vunpack.c.l.b16 %v59
    %v99 = vunpack.c.l.b16 %v60
    %v100 = vunpack.c.l.b16 %v61
    %v101 = vunpack.c.l.b16 %v62
    %v102 = vunpack.c.l.b16 %v63
    %v103 = vunpack.c.l.b16 %v64
    %v104 = vunpack.c.l.b16 %v65
    %v105 = vunpack.c.l.b16 %v66
    %v106 = vunpack.c.l.b16 %v67
    %v107 = vpack.c.b16 %v92, %v91
    %v108 = vpack.c.b16 %v94, %v93
    %v109 = vpack.c.b16 %v96, %v95
    %v110 = vpack.c.b16 %v98, %v97
    %v111 = vpack.c.b16 %v100, %v99
    %v112 = vpack.c.b16 %v102, %v101
    %v113 = vpack.c.b16 %v104, %v103
    %v114 = vpack.c.b16 %v106, %v105
    %123 = vmatprep.subr.bf16.mxu0 0
    %124 = vmatpush1.bf16.msra.mxu0 %v107
    %125 = vmatprep.subr.bf16.mxu0 0
    %126 = vmatpush1.bf16.msra.mxu0 %v108
    %127 = vmatprep.subr.bf16.mxu0 0
    %128 = vmatpush1.bf16.msra.mxu0 %v109
    %129 = vmatprep.subr.bf16.mxu0 0
    %130 = vmatpush1.bf16.msra.mxu0 %v110
    %131 = vmatprep.subr.bf16.mxu0 0
    %132 = vmatpush1.bf16.msra.mxu0 %v111
    %133 = vmatprep.subr.bf16.mxu0 0
    %134 = vmatpush1.bf16.msra.mxu0 %v112
    %135 = vmatprep.subr.bf16.mxu0 0
    %136 = vmatpush1.bf16.msra.mxu0 %v113
    %137 = vmatprep.subr.bf16.mxu0 0
    %138 = vmatpush1.bf16.msra.mxu0 %v114
    %139 = vmatprep.subr.bf16.mxu0 0
    %140 = vmatpush1.bf16.msra.mxu0 0
    %141 = vmatprep.subr.bf16.mxu0 0
    %142 = vmatpush1.bf16.msra.mxu0 0
    %143 = vmatprep.subr.bf16.mxu0 0
    %144 = vmatpush1.bf16.msra.mxu0 0
    %145 = vmatprep.subr.bf16.mxu0 0
    %146 = vmatpush1.bf16.msra.mxu0 0
    %147 = vmatprep.subr.bf16.mxu0 0
    %148 = vmatpush1.bf16.msra.mxu0 0
    %149 = vmatprep.subr.bf16.mxu0 0
    %150 = vmatpush1.bf16.msra.mxu0 0
    %151 = vmatprep.subr.bf16.mxu0 0
    %152 = vmatpush1.bf16.msra.mxu0 0
    %153 = vmatprep.subr.bf16.mxu0 0
    %154 = vmatpush1.bf16.msra.mxu0 0
    %155 = vmatprep.mubr.bf16.mxu0 0
    %156 = vmatmul.mubr.bf16.gmra.mrb[0].mxu0 %v51
    %v157 = vpop.f32.mrb[0].mxu0
    %v158 = vadd.f32 %v73, %v157
    %v159 = vpop.f32.mrb[0].mxu0
    %v160 = vpop.f32.mrb[0].mxu0
    %v161 = vadd.f32 %v73, %v160
    %v162 = vpop.f32.mrb[0].mxu0
    %163 = vdwg.mxu0
    %v164 = vmax.f32 %v158, 0.0
    %v165 = vmax.f32 %v161, 0.0
    %v166 = vpack.c.bf16 %v165, %v164
    %v167 = vld [vmem:[#allocation4] sm:$0xf]
    %v168 = vld [vmem:[#allocation4 + $0x4] sm:$0xf]
    %v169 = vld [vmem:[#allocation4 + $0x8] sm:$0xf]
    %v170 = vld [vmem:[#allocation4 + $0xc] sm:$0xf]
    %v171 = vld [vmem:[#allocation4 + $0x10] sm:$0xf]
    %v172 = vld [vmem:[#allocation4 + $0x14] sm:$0xf]
    %v173 = vld [vmem:[#allocation4 + $0x18] sm:$0xf]
    %v174 = vld [vmem:[#allocation4 + $0x1c] sm:$0xf]
    %v175 = vld [vmem:[#allocation4 + $0x20] sm:$0xf]
    %v176 = vld [vmem:[#allocation4 + $0x24] sm:$0xf]
    %v177 = vld [vmem:[#allocation4 + $0x28] sm:$0xf]
    %v178 = vld [vmem:[#allocation4 + $0x2c] sm:$0xf]
    %v179 = vld [vmem:[#allocation4 + $0x30] sm:$0xf]
    %v180 = vld [vmem:[#allocation4 + $0x34] sm:$0xf]
    %v181 = vld [vmem:[#allocation4 + $0x38] sm:$0xf]
    %v182 = vld [vmem:[#allocation4 + $0x3c] sm:$0xf]
    %v183 = vld [vmem:[%s4] sm:$0x1]
    %v185 = vlaneseq
    %v186 = vshrl.u32 %v185, 7
    %v187 = vsub.s32 0, %v186
    %v188 = vrot.slane %v183, %v187
    %v206 = vunpack.c.l.b16 %v167
    %v207 = vunpack.c.l.b16 %v168
    %v208 = vunpack.c.l.b16 %v169
    %v209 = vunpack.c.l.b16 %v170
    %v210 = vunpack.c.l.b16 %v171
    %v211 = vunpack.c.l.b16 %v172
    %v212 = vunpack.c.l.b16 %v173
    %v213 = vunpack.c.l.b16 %v174
    %v214 = vunpack.c.l.b16 %v175
    %v215 = vunpack.c.l.b16 %v176
    %v216 = vunpack.c.l.b16 %v177
    %v217 = vunpack.c.l.b16 %v178
    %v218 = vunpack.c.l.b16 %v179
    %v219 = vunpack.c.l.b16 %v180
    %v220 = vunpack.c.l.b16 %v181
    %v221 = vunpack.c.l.b16 %v182
    %v222 = vpack.c.b16 %v207, %v206
    %v223 = vpack.c.b16 %v209, %v208
    %v224 = vpack.c.b16 %v211, %v210
    %v225 = vpack.c.b16 %v213, %v212
    %v226 = vpack.c.b16 %v215, %v214
    %v227 = vpack.c.b16 %v217, %v216
    %v228 = vpack.c.b16 %v219, %v218
    %v229 = vpack.c.b16 %v221, %v220
    %238 = vmatprep.subr.bf16.mxu0 0
    %239 = vmatpush1.bf16.msra.mxu0 %v222
    %240 = vmatprep.subr.bf16.mxu0 0
    %241 = vmatpush1.bf16.msra.mxu0 %v223
    %242 = vmatprep.subr.bf16.mxu0 0
    %243 = vmatpush1.bf16.msra.mxu0 %v224
    %244 = vmatprep.subr.bf16.mxu0 0
    %245 = vmatpush1.bf16.msra.mxu0 %v225
    %246 = vmatprep.subr.bf16.mxu0 0
    %247 = vmatpush1.bf16.msra.mxu0 %v226
    %248 = vmatprep.subr.bf16.mxu0 0
    %249 = vmatpush1.bf16.msra.mxu0 %v227
    %250 = vmatprep.subr.bf16.mxu0 0
    %251 = vmatpush1.bf16.msra.mxu0 %v228
    %252 = vmatprep.subr.bf16.mxu0 0
    %253 = vmatpush1.bf16.msra.mxu0 %v229
    %254 = vmatprep.subr.bf16.mxu0 0
    %255 = vmatpush1.bf16.msra.mxu0 0
    %256 = vmatprep.subr.bf16.mxu0 0
    %257 = vmatpush1.bf16.msra.mxu0 0
    %258 = vmatprep.subr.bf16.mxu0 0
    %259 = vmatpush1.bf16.msra.mxu0 0
    %260 = vmatprep.subr.bf16.mxu0 0
    %261 = vmatpush1.bf16.msra.mxu0 0
    %262 = vmatprep.subr.bf16.mxu0 0
    %263 = vmatpush1.bf16.msra.mxu0 0
    %264 = vmatprep.subr.bf16.mxu0 0
    %265 = vmatpush1.bf16.msra.mxu0 0
    %266 = vmatprep.subr.bf16.mxu0 0
    %267 = vmatpush1.bf16.msra.mxu0 0
    %268 = vmatprep.subr.bf16.mxu0 0
    %269 = vmatpush1.bf16.msra.mxu0 0
    %270 = vmatprep.mubr.bf16.mxu0 0
    %271 = vmatmul.mubr.bf16.gmra.mrb[0].mxu0 %v166
    %v272 = vpop.f32.mrb[0].mxu0
    %v273 = vadd.f32 %v188, %v272
    %v274 = vpop.f32.mrb[0].mxu0
    %v275 = vpop.f32.mrb[0].mxu0
    %v276 = vadd.f32 %v188, %v275
    %v277 = vpop.f32.mrb[0].mxu0
    %278 = vdwg.mxu0
    %279 = vst [vmem:[%s5] sm:$0xff] %v273
    %280 = vst [vmem:[%s5 + $0x8] sm:$0xff] %v276
    // Predicated region
    $region30: #{mlp_forward.1} parent=1 // pred_check
      _
    $region31: #{mlp_forward.1} parent=1 // pred_check_branch
      %282 = sbr.rel (0) target = $region33
    $region32: #{mlp_forward.1} parent=1 // pred_region
      _
    $region33: #{mlp_forward.1} parent=1 // pred_fallthru
      _
    // Predicated region
    $region34: #{mlp_forward.1} parent=1 // pred_check
      _
    $region35: #{mlp_forward.1} parent=1 // pred_check_branch
      %284 = sbr.rel (0) target = $region37
    $region36: #{mlp_forward.1} parent=1 // pred_region
      _
    $region37: #{mlp_forward.1} parent=1 // pred_fallthru
      _
    %285 = vsyncpa [#allocation3], 1
    %286 = vsyncpa [#allocation5], 1

</llo_original>
